<compile_context>
chip_gen: v7x
topology: tpu7x:2x2x1
jax: 0.10.0
libtpu: 0.0.40
codegen_flags: <defaults>
</compile_context>

<pallas_src>
import numpy as np
import jax
import jax.numpy as jnp
from jax import lax
from jax.experimental import pallas as pl
from jax.experimental.pallas import tpu as pltpu

_LANE = 128


# ----------------------------------------------------------------------------
# Weight / Toeplitz construction (plain numpy glue, runs once)
# ----------------------------------------------------------------------------
def _build_weights():
    # Deterministic weights exactly as in DebugNet6.__init__
    w1 = np.ones((4, 1, 1, 1), dtype=np.float32)                              # conv1
    w2 = np.arange(4 * 4 * 2 * 2, dtype=np.float32).reshape(4, 4, 2, 2)       # conv2
    w3 = np.arange(6 * 4 * 3 * 3, dtype=np.float32).reshape(6, 4, 3, 3)       # conv3
    return w1, w2, w3


def _build_toeplitz(w1, w2, w3):
    # M1: (1,8,8) -> (4,8,8)   1x1 conv, no bias
    m1 = np.zeros((64, 256), dtype=np.float32)
    for o in range(4):
        for i in range(8):
            for j in range(8):
                m1[i * 8 + j, o * 64 + i * 8 + j] = w1[o, 0, 0, 0]

    # Mpool: (4,8,8) -> (4,4,4)   AvgPool2d(2, 2)
    mp = np.zeros((256, 64), dtype=np.float32)
    for c in range(4):
        for oi in range(4):
            for oj in range(4):
                for di in range(2):
                    for dj in range(2):
                        mp[c * 64 + (2 * oi + di) * 8 + (2 * oj + dj),
                           c * 16 + oi * 4 + oj] = 0.25

    # M2: (4,4,4) -> (4,3,3)   2x2 conv, VALID
    m2 = np.zeros((64, 36), dtype=np.float32)
    for o in range(4):
        for c in range(4):
            for oi in range(3):
                for oj in range(3):
                    for ki in range(2):
                        for kj in range(2):
                            m2[c * 16 + (oi + ki) * 4 + (oj + kj),
                               o * 9 + oi * 3 + oj] += w2[o, c, ki, kj]

    # M3: (4,3,3) -> (6,3,3)   3x3 conv, padding=1
    m3 = np.zeros((36, 54), dtype=np.float32)
    for o in range(6):
        for c in range(4):
            for oi in range(3):
                for oj in range(3):
                    for ki in range(3):
                        for kj in range(3):
                            ii, jj = oi + ki - 1, oj + kj - 1
                            if 0 <= ii < 3 and 0 <= jj < 3:
                                m3[c * 9 + ii * 3 + jj,
                                   o * 9 + oi * 3 + oj] += w3[o, c, ki, kj]
    return m1, mp, m2, m3


def _build_kernel_mats(w1, w2, w3):
    """Fuse linear stages and pad to lane-dense (128-multiple) column widths."""
    m1, mp, m2, m3 = _build_toeplitz(w1, w2, w3)

    # AvgPool and conv2 are back-to-back linear ops (no ReLU between): always fuse.
    mp2 = mp @ m2                                             # (256, 36)

    # conv1 is a 1x1 single-tap map with nonnegative weights, so
    # ReLU(conv1(x)) == conv1(ReLU(x)) and conv1 folds into the pool/conv2 matrix.
    # (Weight-specific; fall back to the 3-matmul chain otherwise.)
    can_fuse_conv1 = (w1.shape[2] == 1 and w1.shape[3] == 1 and np.all(w1 >= 0.0))
    if can_fuse_conv1:
        chain = [m1 @ mp2, m3]                                # (64,36), (36,54)
        pre_relu = True
    else:
        chain = [m1, mp2, m3]                                 # (64,256), (256,36), (36,54)
        pre_relu = False

    out_cols = chain[-1].shape[1]                             # 54

    # Zero-pad columns to multiples of 128 lanes; rows of each matrix pad up to the
    # previous stage's padded width (zero rows x zero activations -> no effect).
    padded = []
    in_dim = 64                                               # x flat width (full-array dim)
    for m in chain:
        r, c = m.shape
        c_pad = ((c + _LANE - 1) // _LANE) * _LANE
        pm = np.zeros((in_dim, c_pad), dtype=np.float32)
        pm[:r, :c] = m
        padded.append(jnp.asarray(pm))
        in_dim = c_pad

    return padded, pre_relu, out_cols


# ----------------------------------------------------------------------------
# Pallas kernel
# ----------------------------------------------------------------------------
def _make_kernel(n_mats, pre_relu, compute_dtype):
    def kernel(*refs):
        x_ref = refs[0]
        mat_refs = refs[1:1 + n_mats]
        o_ref = refs[1 + n_mats]

        y = x_ref[...]
        if pre_relu:
            y = jnp.maximum(y, 0)                             # ReLU hoisted through conv1
        for m_ref in mat_refs:
            y = jnp.dot(y.astype(compute_dtype), m_ref[...],
                        preferred_element_type=jnp.float32)   # MXU, f32 accumulation
            y = jnp.maximum(y, 0.0)                           # ReLU after every conv stage
        o_ref[...] = y.astype(o_ref.dtype)
    return kernel


def debugnet6_forward(x, mats, pre_relu, out_cols, *, tm=512,
                      compute_dtype=jnp.float32):
    """x: (B, 1, 8, 8) -> (B, 54) matching DebugNet6.forward."""
    B = x.shape[0]
    x_flat = x.reshape(B, -1).astype(compute_dtype)           # NCHW flatten (C=1) -> (B, 64)
    K = x_flat.shape[1]
    n_out_pad = mats[-1].shape[1]                             # 128 (lane-dense output)

    # Batch tile: multiple of 8 sublanes, capped by (padded) batch size.
    tm = max(8, min(tm, ((B + 7) // 8) * 8))
    B_pad = ((B + tm - 1) // tm) * tm
    if B_pad != B:
        x_flat = jnp.pad(x_flat, ((0, B_pad - B), (0, 0)))

    mats_c = [m.astype(compute_dtype) for m in mats]
    n_mats = len(mats_c)

    in_specs = [pl.BlockSpec((tm, K), lambda i: (i, 0))]      # streamed, double-buffered
    in_specs += [pl.BlockSpec(m.shape, lambda i: (0, 0))      # VMEM-resident weights
                 for m in mats_c]

    out = pl.pallas_call(
        _make_kernel(n_mats, pre_relu, compute_dtype),
        out_shape=jax.ShapeDtypeStruct((B_pad, n_out_pad), jnp.float32),
        grid_spec=pl.GridSpec(
            grid=(B_pad // tm,),
            in_specs=in_specs,
            out_specs=pl.BlockSpec((tm, n_out_pad), lambda i: (i, 0)),
        ),
        compiler_params=pltpu.CompilerParams(
            dimension_semantics=("parallel",),                # megacore sharding on v7x
            vmem_limit_bytes=32 * 1024 * 1024,
        ),
    )(x_flat, *mats_c)

    return out[:B, :out_cols]


# ----------------------------------------------------------------------------
# Pure-JAX reference mirroring the PyTorch forward (NCHW)
# ----------------------------------------------------------------------------
def ref_forward(x, w1, w2, w3):
    dn = ('NCHW', 'OIHW', 'NCHW')
    y = lax.conv_general_dilated(x, w1, (1, 1), 'VALID', dimension_numbers=dn)
    y = jnp.maximum(y, 0.0)
    y = lax.reduce_window(y, 0.0, lax.add, (1, 1, 2, 2), (1, 1, 2, 2), 'VALID') / 4.0
    y = lax.conv_general_dilated(y, w2, (1, 1), 'VALID', dimension_numbers=dn)
    y = jnp.maximum(y, 0.0)
    y = lax.conv_general_dilated(y, w3, (1, 1), [(1, 1), (1, 1)], dimension_numbers=dn)
    y = jnp.maximum(y, 0.0)
    return y.reshape(-1, 6 * 9)


if __name__ == "__main__":
    w1, w2, w3 = _build_weights()
    mats, pre_relu, out_cols = _build_kernel_mats(w1, w2, w3)

    # The final x.view(-1, 6*9) implies a 1-channel 8x8 input
    # (8x8 -> conv1x1 -> pool -> 4x4 -> conv2x2 -> 3x3 -> conv3x3(pad1) -> 3x3, 6 ch).
    key = jax.random.PRNGKey(0)
    x = jax.random.normal(key, (2, 1, 8, 8), dtype=jnp.float32)

    out = debugnet6_forward(x, mats, pre_relu, out_cols)
    out = jax.block_until_ready(out)

    ref = ref_forward(x, jnp.asarray(w1), jnp.asarray(w2), jnp.asarray(w3))
    assert out.shape == (2, 54), out.shape
    np.testing.assert_allclose(np.asarray(out), np.asarray(ref), rtol=2e-2, atol=1e-2)
    print("KERNEL_OK")
</pallas_src>

<mosaic_0001>
module attributes {stable_mosaic.version = 11 : i64} {
  func.func @kernel(%arg0: i32, %arg1: memref<8x64xf32, #tpu.memory_space<vmem>>, %arg2: memref<64x128xf32, #tpu.memory_space<vmem>>, %arg3: memref<128x128xf32, #tpu.memory_space<vmem>>, %arg4: memref<8x128xf32, #tpu.memory_space<vmem>>) attributes {dimension_semantics = [#tpu.dimension_semantics<parallel>], iteration_bounds = array<i64: 1>, scalar_prefetch = 0 : i64, scratch_operands = 0 : i64, tpu.core_type = #tpu.core_type<tc>, window_params = [{transform_indices = @transform_0, window_bounds = array<i64: 8, 64>}, {pipeline_mode = #tpu.pipeline_mode<synchronous>, transform_indices = @transform_1, window_bounds = array<i64: 64, 128>}, {pipeline_mode = #tpu.pipeline_mode<synchronous>, transform_indices = @transform_2, window_bounds = array<i64: 128, 128>}, {transform_indices = @transform_3, window_bounds = array<i64: 8, 128>}]} {
    %c0 = arith.constant 0 : index
    %c0_0 = arith.constant 0 : index
    %0 = vector.load %arg1[%c0, %c0_0] : memref<8x64xf32, #tpu.memory_space<vmem>>, vector<8x64xf32>
    %cst = arith.constant 0.000000e+00 : f32
    %1 = vector.broadcast %cst : f32 to vector<8x64xf32>
    %2 = arith.maximumf %0, %1 : vector<8x64xf32>
    %c0_1 = arith.constant 0 : index
    %c0_2 = arith.constant 0 : index
    %3 = vector.load %arg2[%c0_1, %c0_2] : memref<64x128xf32, #tpu.memory_space<vmem>>, vector<64x128xf32>
    %cst_3 = arith.constant dense<0.000000e+00> : vector<8x128xf32>
    %4 = tpu.matmul %2, %3, %cst_3 {dimension_numbers = #tpu.dot_dimension_numbers<[1], [0], [0], [1], [0, 0, 1, 1], [], []>} : vector<8x64xf32>, vector<64x128xf32>, vector<8x128xf32> -> vector<8x128xf32>
    %cst_4 = arith.constant 0.000000e+00 : f32
    %5 = vector.broadcast %cst_4 : f32 to vector<8x128xf32>
    %6 = arith.maximumf %4, %5 : vector<8x128xf32>
    %c0_5 = arith.constant 0 : index
    %c0_6 = arith.constant 0 : index
    %7 = vector.load %arg3[%c0_5, %c0_6] : memref<128x128xf32, #tpu.memory_space<vmem>>, vector<128x128xf32>
    %cst_7 = arith.constant dense<0.000000e+00> : vector<8x128xf32>
    %8 = tpu.matmul %6, %7, %cst_7 {dimension_numbers = #tpu.dot_dimension_numbers<[1], [0], [0], [1], [0, 0, 1, 1], [], []>} : vector<8x128xf32>, vector<128x128xf32>, vector<8x128xf32> -> vector<8x128xf32>
    %cst_8 = arith.constant 0.000000e+00 : f32
    %9 = vector.broadcast %cst_8 : f32 to vector<8x128xf32>
    %10 = arith.maximumf %8, %9 : vector<8x128xf32>
    %c0_9 = arith.constant 0 : index
    %c0_10 = arith.constant 0 : index
    %11 = vector.load %arg4[%c0_9, %c0_10] : memref<8x128xf32, #tpu.memory_space<vmem>>, vector<8x128xf32>
    tpu.vector_store %arg4[%c0_9, %c0_10], %10 {strides = array<i32>} : memref<8x128xf32, #tpu.memory_space<vmem>>, vector<8x128xf32>,
    return
  }
  func.func @transform_0(%arg0: i32) -> (i32, i32) {
    %c0_i32 = arith.constant 0 : i32
    %c0_i32_0 = arith.constant 0 : i32
    return %arg0, %c0_i32 : i32, i32
  }
  func.func @transform_1(%arg0: i32) -> (i32, i32) {
    %c0_i32 = arith.constant 0 : i32
    %c0_i32_0 = arith.constant 0 : i32
    %c0_i32_1 = arith.constant 0 : i32
    return %c0_i32, %c0_i32_0 : i32, i32
  }
  func.func @transform_2(%arg0: i32) -> (i32, i32) {
    %c0_i32 = arith.constant 0 : i32
    %c0_i32_0 = arith.constant 0 : i32
    %c0_i32_1 = arith.constant 0 : i32
    return %c0_i32, %c0_i32_0 : i32, i32
  }
  func.func @transform_3(%arg0: i32) -> (i32, i32) {
    %c0_i32 = arith.constant 0 : i32
    %c0_i32_0 = arith.constant 0 : i32
    return %arg0, %c0_i32 : i32, i32
  }
}

</mosaic_0001>

<llo_original>
// kernel: tpu_custom_call.1
$region0: #{tpu_custom_call.1}
  #allocation0 [shape = 'u32[]', space=smem, size = 0x4, offset = 0x4, fixed_abs, tag = 'smem constant byte address 0x4 - core index']
  #allocation1 [shape = 'u32[144,128]{1,0:T(1,128)}', space=vmem, size = 0x12000, scoped, tag = 'internal scratch']
  %s0 = inlined_call_operand.hbm [shape: f32[8,64], index: 0, kind: input, shape index: {}]
  %s1 = inlined_call_operand.hbm [shape: f32[64,128], index: 1, kind: input, shape index: {}]
  %s2 = inlined_call_operand.hbm [shape: f32[128,128], index: 2, kind: input, shape index: {}]
  %s3 = inlined_call_operand.hbm [shape: f32[8,128], index: 3, kind: output, shape index: {}]
  %s4 = sld [smem:[#allocation0]]
  $region34: #{tpu_custom_call.1} parent=0
    _
  %s6 = ssub.s32 1, %s4
  %s7 = scalar_select 0, %s6, %s4
  $region1: #{tpu_custom_call.1} parent=0
    #allocation2 [shape = 'u8[4096]{0}', space=vmem, size = 0x1000, scoped, tag = 'input window, operand 0, single buffered']
    #allocation3 [shape = 's32[1]{0}', space=sflag, size = 0x4, scoped, tag = 'scoped memory for tpu_custom_call.1']
    #allocation4 [shape = 's32[1]{0}', space=sflag, size = 0x4, scoped, tag = 'scoped memory for tpu_custom_call.1']
    #allocation5 [shape = 'u8[32768]{0}', space=vmem, size = 0x8000, scoped, tag = 'input window, operand 1, single buffered']
    #allocation6 [shape = 's32[1]{0}', space=sflag, size = 0x4, scoped, tag = 'scoped memory for tpu_custom_call.1']
    #allocation7 [shape = 'u8[65536]{0}', space=vmem, size = 0x10000, scoped, tag = 'input window, operand 2, single buffered']
    #allocation8 [shape = 'u8[4096]{0}', space=vmem, size = 0x1000, scoped, tag = 'output window, operand 0, single buffered']
    %8 = vsyncpa [#allocation3], 0
    %9 = vsyncpa [#allocation6], 0
    %10 = vsyncpa [#allocation4], 0
    // Predicated region
    $region2: #{tpu_custom_call.1} parent=1 // pred_check
      _
    $region3: #{tpu_custom_call.1} parent=1 // pred_check_branch
      %12 = sbr.rel (0) target = $region5
    $region4: #{tpu_custom_call.1} parent=1 // pred_region
      %s14 = ssub.s32 128, 128
      %15 = vsyncadd [#allocation3], %s14
      %s17 = sshll.u32 [#allocation2], 4
      %s18 = int_to_ptr.vmem [resolvable:$true] %s17
      %20 = dma.hbm_to_vmem [thread:$0]  %s0, 128, %s18, [#allocation3]
    $region5: #{tpu_custom_call.1} parent=1 // pred_fallthru
      _
    // Predicated region
    $region6: #{tpu_custom_call.1} parent=1 // pred_check
      _
    $region7: #{tpu_custom_call.1} parent=1 // pred_check_branch
      %22 = sbr.rel (0) target = $region9
    $region8: #{tpu_custom_call.1} parent=1 // pred_region
      %s24 = ssub.s32 1024, 1024
      %25 = vsyncadd [#allocation6], %s24
      %s26 = sshll.u32 [#allocation5], 4
      %s27 = int_to_ptr.vmem [resolvable:$true] %s26
      %32 = dma.hbm_to_vmem [thread:$0]  %s1, 1024, %s27, [#allocation6], 128, 128, 8
    $region9: #{tpu_custom_call.1} parent=1 // pred_fallthru
      _
    // Predicated region
    $region10: #{tpu_custom_call.1} parent=1 // pred_check
      _
    $region11: #{tpu_custom_call.1} parent=1 // pred_check_branch
      %34 = sbr.rel (0) target = $region13
    $region12: #{tpu_custom_call.1} parent=1 // pred_region
      %s36 = ssub.s32 2048, 2048
      %37 = vsyncadd [#allocation6], %s36
      %s38 = sshll.u32 [#allocation7], 4
      %s39 = int_to_ptr.vmem [resolvable:$true] %s38
      %44 = dma.hbm_to_vmem [thread:$0]  %s2, 2048, %s39, [#allocation6], 128, 128, 8
    $region13: #{tpu_custom_call.1} parent=1 // pred_fallthru
      _
    // Predicated region
    $region14: #{tpu_custom_call.1} parent=1 // pred_check
      _
    $region15: #{tpu_custom_call.1} parent=1 // pred_check_branch
      %46 = sbr.rel (0) target = $region17
    $region16: #{tpu_custom_call.1} parent=1 // pred_region
      %47 = dma.done [#allocation3], 128
    $region17: #{tpu_custom_call.1} parent=1 // pred_fallthru
      _
    // Predicated region
    $region18: #{tpu_custom_call.1} parent=1 // pred_check
      _
    $region19: #{tpu_custom_call.1} parent=1 // pred_check_branch
      %49 = sbr.rel (0) target = $region21
    $region20: #{tpu_custom_call.1} parent=1 // pred_region
      %50 = dma.done [#allocation6], 1024
    $region21: #{tpu_custom_call.1} parent=1 // pred_fallthru
      _
    // Predicated region
    $region22: #{tpu_custom_call.1} parent=1 // pred_check
      _
    $region23: #{tpu_custom_call.1} parent=1 // pred_check_branch
      %52 = sbr.rel (0) target = $region25
    $region24: #{tpu_custom_call.1} parent=1 // pred_region
      %53 = dma.done [#allocation6], 2048
    $region25: #{tpu_custom_call.1} parent=1 // pred_fallthru
      _
    %v54 = vld [vmem:[#allocation2] sm:$0xff]
    %v55 = vmax.f32 %v54, 0.0
    %v56 = vld [vmem:[#allocation5] sm:$0xff]
    %v57 = vld [vmem:[#allocation5 + $0x8] sm:$0xff]
    %v58 = vld [vmem:[#allocation5 + $0x10] sm:$0xff]
    %v59 = vld [vmem:[#allocation5 + $0x18] sm:$0xff]
    %v60 = vld [vmem:[#allocation5 + $0x20] sm:$0xff]
    %v61 = vld [vmem:[#allocation5 + $0x28] sm:$0xff]
    %v62 = vld [vmem:[#allocation5 + $0x30] sm:$0xff]
    %v63 = vld [vmem:[#allocation5 + $0x38] sm:$0xff]
    %vm64 = vcmask 523264
    %v66 = vsel %vm64, %v55, 0
    %68 = vmatprep.subr.mxu0 0.0
    %69 = vmatpush1.msra.mxu0 %v56
    %70 = vmatprep.subr.mxu0 0.0
    %71 = vmatpush1.msra.mxu0 %v57
    %72 = vmatprep.subr.mxu0 0.0
    %73 = vmatpush1.msra.mxu0 %v58
    %74 = vmatprep.subr.mxu0 0.0
    %75 = vmatpush1.msra.mxu0 %v59
    %76 = vmatprep.subr.mxu0 0.0
    %77 = vmatpush1.msra.mxu0 %v60
    %78 = vmatprep.subr.mxu0 0.0
    %79 = vmatpush1.msra.mxu0 %v61
    %80 = vmatprep.subr.mxu0 0.0
    %81 = vmatpush1.msra.mxu0 %v62
    %82 = vmatprep.subr.mxu0 0.0
    %83 = vmatpush1.msra.mxu0 %v63
    %84 = vmatprep.subr.mxu0 0.0
    %85 = vmatpush1.msra.mxu0 0.0
    %86 = vmatprep.subr.mxu0 0.0
    %87 = vmatpush1.msra.mxu0 0.0
    %88 = vmatprep.subr.mxu0 0.0
    %89 = vmatpush1.msra.mxu0 0.0
    %90 = vmatprep.subr.mxu0 0.0
    %91 = vmatpush1.msra.mxu0 0.0
    %92 = vmatprep.subr.mxu0 0.0
    %93 = vmatpush1.msra.mxu0 0.0
    %94 = vmatprep.subr.mxu0 0.0
    %95 = vmatpush1.msra.mxu0 0.0
    %96 = vmatprep.subr.mxu0 0.0
    %97 = vmatpush1.msra.mxu0 0.0
    %98 = vmatprep.subr.mxu0 0.0
    %99 = vmatpush1.msra.mxu0 0.0
    %100 = vmatprep.subr.mxu0 0.0
    %101 = vmatpush1.msra.mxu0 0.0
    %102 = vmatprep.subr.mxu0 0.0
    %103 = vmatpush1.msra.mxu0 0.0
    %104 = vmatprep.subr.mxu0 0.0
    %105 = vmatpush1.msra.mxu0 0.0
    %106 = vmatprep.subr.mxu0 0.0
    %107 = vmatpush1.msra.mxu0 0.0
    %108 = vmatprep.subr.mxu0 0.0
    %109 = vmatpush1.msra.mxu0 0.0
    %110 = vmatprep.subr.mxu0 0.0
    %111 = vmatpush1.msra.mxu0 0.0
    %112 = vmatprep.subr.mxu0 0.0
    %113 = vmatpush1.msra.mxu0 0.0
    %114 = vmatprep.subr.mxu0 0.0
    %115 = vmatpush1.msra.mxu0 0.0
    %116 = vmatprep.subr.mxu0 0.0
    %117 = vmatpush1.msra.mxu0 0.0
    %118 = vmatprep.subr.mxu0 0.0
    %119 = vmatpush1.msra.mxu0 0.0
    %120 = vmatprep.subr.mxu0 0.0
    %121 = vmatpush1.msra.mxu0 0.0
    %122 = vmatprep.subr.mxu0 0.0
    %123 = vmatpush1.msra.mxu0 0.0
    %124 = vmatprep.subr.mxu0 0.0
    %125 = vmatpush1.msra.mxu0 0.0
    %126 = vmatprep.subr.mxu0 0.0
    %127 = vmatpush1.msra.mxu0 0.0
    %128 = vmatprep.subr.mxu0 0.0
    %129 = vmatpush1.msra.mxu0 0.0
    %130 = vmatprep.subr.mxu0 0.0
    %131 = vmatpush1.msra.mxu0 0.0
    %132 = vmatprep.mubr.f32.mxu0 0.0
    %133 = vmatmul.mubr.f32.gmra.mrb[0].mxu0 %v66
    %v134 = vpop.f32.mrb[0].mxu0
    %v135 = vadd.f32 0.0, %v134
    %v136 = vpop.f32.mrb[0].mxu0
    %137 = vdwg.mxu0
    %v138 = vmax.f32 %v135, 0.0
    %v139 = vld [vmem:[#allocation7] sm:$0xff]
    %v140 = vld [vmem:[#allocation7 + $0x8] sm:$0xff]
    %v141 = vld [vmem:[#allocation7 + $0x10] sm:$0xff]
    %v142 = vld [vmem:[#allocation7 + $0x18] sm:$0xff]
    %v143 = vld [vmem:[#allocation7 + $0x20] sm:$0xff]
    %v144 = vld [vmem:[#allocation7 + $0x28] sm:$0xff]
    %v145 = vld [vmem:[#allocation7 + $0x30] sm:$0xff]
    %v146 = vld [vmem:[#allocation7 + $0x38] sm:$0xff]
    %v147 = vld [vmem:[#allocation7 + $0x40] sm:$0xff]
    %v148 = vld [vmem:[#allocation7 + $0x48] sm:$0xff]
    %v149 = vld [vmem:[#allocation7 + $0x50] sm:$0xff]
    %v150 = vld [vmem:[#allocation7 + $0x58] sm:$0xff]
    %v151 = vld [vmem:[#allocation7 + $0x60] sm:$0xff]
    %v152 = vld [vmem:[#allocation7 + $0x68] sm:$0xff]
    %v153 = vld [vmem:[#allocation7 + $0x70] sm:$0xff]
    %v154 = vld [vmem:[#allocation7 + $0x78] sm:$0xff]
    %155 = vmatprep.subr.mxu0 0.0
    %156 = vmatpush1.msra.mxu0 %v139
    %157 = vmatprep.subr.mxu0 0.0
    %158 = vmatpush1.msra.mxu0 %v140
    %159 = vmatprep.subr.mxu0 0.0
    %160 = vmatpush1.msra.mxu0 %v141
    %161 = vmatprep.subr.mxu0 0.0
    %162 = vmatpush1.msra.mxu0 %v142
    %163 = vmatprep.subr.mxu0 0.0
    %164 = vmatpush1.msra.mxu0 %v143
    %165 = vmatprep.subr.mxu0 0.0
    %166 = vmatpush1.msra.mxu0 %v144
    %167 = vmatprep.subr.mxu0 0.0
    %168 = vmatpush1.msra.mxu0 %v145
    %169 = vmatprep.subr.mxu0 0.0
    %170 = vmatpush1.msra.mxu0 %v146
    %171 = vmatprep.subr.mxu0 0.0
    %172 = vmatpush1.msra.mxu0 %v147
    %173 = vmatprep.subr.mxu0 0.0
    %174 = vmatpush1.msra.mxu0 %v148
    %175 = vmatprep.subr.mxu0 0.0
    %176 = vmatpush1.msra.mxu0 %v149
    %177 = vmatprep.subr.mxu0 0.0
    %178 = vmatpush1.msra.mxu0 %v150
    %179 = vmatprep.subr.mxu0 0.0
    %180 = vmatpush1.msra.mxu0 %v151
    %181 = vmatprep.subr.mxu0 0.0
    %182 = vmatpush1.msra.mxu0 %v152
    %183 = vmatprep.subr.mxu0 0.0
    %184 = vmatpush1.msra.mxu0 %v153
    %185 = vmatprep.subr.mxu0 0.0
    %186 = vmatpush1.msra.mxu0 %v154
    %187 = vmatprep.subr.mxu0 0.0
    %188 = vmatpush1.msra.mxu0 0.0
    %189 = vmatprep.subr.mxu0 0.0
    %190 = vmatpush1.msra.mxu0 0.0
    %191 = vmatprep.subr.mxu0 0.0
    %192 = vmatpush1.msra.mxu0 0.0
    %193 = vmatprep.subr.mxu0 0.0
    %194 = vmatpush1.msra.mxu0 0.0
    %195 = vmatprep.subr.mxu0 0.0
    %196 = vmatpush1.msra.mxu0 0.0
    %197 = vmatprep.subr.mxu0 0.0
    %198 = vmatpush1.msra.mxu0 0.0
    %199 = vmatprep.subr.mxu0 0.0
    %200 = vmatpush1.msra.mxu0 0.0
    %201 = vmatprep.subr.mxu0 0.0
    %202 = vmatpush1.msra.mxu0 0.0
    %203 = vmatprep.subr.mxu0 0.0
    %204 = vmatpush1.msra.mxu0 0.0
    %205 = vmatprep.subr.mxu0 0.0
    %206 = vmatpush1.msra.mxu0 0.0
    %207 = vmatprep.subr.mxu0 0.0
    %208 = vmatpush1.msra.mxu0 0.0
    %209 = vmatprep.subr.mxu0 0.0
    %210 = vmatpush1.msra.mxu0 0.0
    %211 = vmatprep.subr.mxu0 0.0
    %212 = vmatpush1.msra.mxu0 0.0
    %213 = vmatprep.subr.mxu0 0.0
    %214 = vmatpush1.msra.mxu0 0.0
    %215 = vmatprep.subr.mxu0 0.0
    %216 = vmatpush1.msra.mxu0 0.0
    %217 = vmatprep.subr.mxu0 0.0
    %218 = vmatpush1.msra.mxu0 0.0
    %219 = vmatprep.mubr.f32.mxu0 0.0
    %220 = vmatmul.mubr.f32.gmra.mrb[0].mxu0 %v138
    %v221 = vpop.f32.mrb[0].mxu0
    %v222 = vadd.f32 0.0, %v221
    %v223 = vpop.f32.mrb[0].mxu0
    %224 = vdwg.mxu0
    %v225 = vmax.f32 %v222, 0.0
    %226 = vst [vmem:[#allocation8] sm:$0xff] %v225
    // Predicated region
    $region26: #{tpu_custom_call.1} parent=1 // pred_check
      _
    $region27: #{tpu_custom_call.1} parent=1 // pred_check_branch
      %228 = sbr.rel (0) target = $region29
    $region28: #{tpu_custom_call.1} parent=1 // pred_region
      %s230 = ssub.s32 128, 128
      %231 = vsyncadd [#allocation4], %s230
      %s233 = sshll.u32 [#allocation8], 4
      %s234 = int_to_ptr.vmem [resolvable:$true] %s233
      %236 = dma.vmem_to_hbm [thread:$0]  %s234, 128, %s3, [#allocation4]
    $region29: #{tpu_custom_call.1} parent=1 // pred_fallthru
      _
    // Predicated region
    $region30: #{tpu_custom_call.1} parent=1 // pred_check
      _
    $region31: #{tpu_custom_call.1} parent=1 // pred_check_branch
      %238 = sbr.rel (0) target = $region33
    $region32: #{tpu_custom_call.1} parent=1 // pred_region
      %239 = dma.done [#allocation4], 128
    $region33: #{tpu_custom_call.1} parent=1 // pred_fallthru
      _
    %240 = vsyncpa [#allocation3], 1
    %241 = vsyncpa [#allocation6], 1
    %242 = vsyncpa [#allocation4], 1

</llo_original>
